<compile_context>
chip_gen: v6e
topology: v6e:2x2x1
jax: 0.10.0
libtpu: 0.0.40
codegen_flags: <defaults>
</compile_context>

<pallas_src>
import functools
import math

import jax
import jax.numpy as jnp
from jax.experimental import pallas as pl
from jax.experimental.pallas import tpu as pltpu


def _round_up(x, m):
    return (x + m - 1) // m * m


def _cider_kernel(z_ref, tgt_ref, mu_ref, out_ref, *, inv_t, n_valid, tile_n):
    """Fused compactness partial-sum + dispersion lse-sum for one batch tile."""
    # mu is resident in VMEM across the grid (constant block index); fold 1/t
    # into it here: C*D multiplies per tile instead of TN*C on the logits.
    mu = mu_ref[...]                                       # (C, D) native dtype
    mu_s = mu * inv_t                                      # (C, D) native dtype

    # ---- compactness: logits on the MXU, operands in their native dtype ----
    s = jax.lax.dot_general(
        z_ref[...], mu_s, (((1,), (1,)), ((), ())),
        preferred_element_type=jnp.float32)                # (TN, C) f32

    # Numerically stable logsumexp over classes.
    m = jnp.max(s, axis=-1, keepdims=True)
    lse = m + jnp.log(jnp.sum(jnp.exp(s - m), axis=-1, keepdims=True))

    # Gather s[i, target_i] via a one-hot compare (no dynamic gather on TPU).
    col = jax.lax.broadcasted_iota(jnp.int32, s.shape, 1)
    picked = jnp.sum(jnp.where(col == tgt_ref[...], s, 0.0),
                     axis=-1, keepdims=True)               # (TN, 1)

    # Mask padded batch rows, then reduce the whole tile to one partial sum.
    row = (jax.lax.broadcasted_iota(jnp.int32, (tile_n, 1), 0)
           + pl.program_id(0) * tile_n)
    per_row = jnp.where(row < n_valid, lse - picked, 0.0)  # (TN, 1)
    comp_partial = jnp.sum(per_row, keepdims=True)         # (1, 1)

    # ---- dispersion: (C, C) Gram of the resident mu, diagonal excluded ----
    g = jax.lax.dot_general(
        mu, mu_s, (((1,), (1,)), ((), ())),
        preferred_element_type=jnp.float32)                # (C, C) f32
    c = g.shape[0]
    r = jax.lax.broadcasted_iota(jnp.int32, (c, c), 0)
    cc = jax.lax.broadcasted_iota(jnp.int32, (c, c), 1)
    g = jnp.where(r == cc, jnp.float32(-1e30), g)          # drop j == i terms
    gm = jnp.max(g, axis=-1, keepdims=True)
    g_lse = gm + jnp.log(jnp.sum(jnp.exp(g - gm), axis=-1, keepdims=True))
    dis_partial = jnp.sum(g_lse, keepdims=True)            # (1, 1)

    # Lane-dense store: row 0 = compactness partial, row 1 = dispersion sum.
    comp_vec = jnp.broadcast_to(comp_partial, (1, 128))
    dis_vec = jnp.broadcast_to(dis_partial, (1, 128))
    out_ref[0] = jnp.concatenate([comp_vec, dis_vec], axis=0)   # (2, 128)


def cider_loss(z, target, mu, *, t=0.1, alpha=1.0, lamda=2.0):
    """z: (N, D) embeddings, target: (N,) int labels, mu: (C, D) prototypes."""
    n, d = z.shape
    c, d_mu = mu.shape
    assert d == d_mu, "feature dims of z and mu must match"
    inv_t = float(1.0 / t)

    # ---- batch tiling: multiple of the sublane granularity, capped at 2048
    # rows; above the cap, force an EVEN tile count so v7x's 2 TCs balance. ----
    gran = 8 if z.dtype.itemsize == 4 else 16
    cap = 2048
    n_pad = _round_up(n, gran)
    if n_pad <= cap:
        tile_n = n_pad
        grid_n = 1
    else:
        grid_n = _round_up(pl.cdiv(n_pad, cap), 2)
        tile_n = _round_up(pl.cdiv(n_pad, grid_n), gran)
        n_pad = grid_n * tile_n

    tgt2d = target.astype(jnp.int32).reshape(n, 1)
    if n_pad != n:
        # Padded rows are masked out inside the kernel before the partial sum.
        z = jnp.pad(z, ((0, n_pad - n), (0, 0)))
        tgt2d = jnp.pad(tgt2d, ((0, n_pad - n), (0, 0)))

    cost = pl.CostEstimate(
        flops=2 * n_pad * d * c + 2 * grid_n * c * d * c,
        transcendentals=n_pad * c + grid_n * c * c,
        bytes_accessed=(n_pad * d * z.dtype.itemsize + n_pad * 4
                        + c * d * mu.dtype.itemsize + grid_n * 2 * 128 * 4),
    )

    partials = pl.pallas_call(
        functools.partial(_cider_kernel, inv_t=inv_t, n_valid=n, tile_n=tile_n),
        out_shape=jax.ShapeDtypeStruct((grid_n, 2, 128), jnp.float32),
        grid_spec=pl.GridSpec(
            grid=(grid_n,),
            in_specs=[
                pl.BlockSpec((tile_n, d), lambda i: (i, 0)),  # z tile (pipelined)
                pl.BlockSpec((tile_n, 1), lambda i: (i, 0)),  # per-row targets
                pl.BlockSpec((c, d), lambda i: (0, 0)),       # mu (DMA'd once)
            ],
            out_specs=pl.BlockSpec((1, 2, 128), lambda i: (i, 0, 0)),
        ),
        compiler_params=pltpu.CompilerParams(
            dimension_semantics=("parallel",),                # megacore on v7x
            vmem_limit_bytes=32 * 1024 * 1024),
        cost_estimate=cost,
    )(z, tgt2d, mu)

    comp_sum = jnp.sum(partials[:, 0, 0])   # sum of per-tile masked partials
    dis_sum = partials[0, 1, 0]             # identical in every tile

    loss_comp = comp_sum / n
    loss_dis = math.log(1.0 / (c - 1)) + dis_sum / c
    return alpha * loss_dis + lamda * loss_comp


if __name__ == "__main__":
    key = jax.random.PRNGKey(0)
    kz, km, kt = jax.random.split(key, 3)

    N, C, D = 32, 10, 128   # D = 128 is hard-coded by the PyTorch module
    z = jax.random.normal(kz, (N, D), dtype=jnp.float32)
    z = z / jnp.linalg.norm(z, axis=-1, keepdims=True)
    mu = jax.random.normal(km, (C, D), dtype=jnp.float32)
    mu = mu / jnp.linalg.norm(mu, axis=-1, keepdims=True)
    target = jax.random.randint(kt, (N,), 0, C, dtype=jnp.int32)

    t, alpha, lamda = 0.1, 1.0, 2.0
    loss_fn = jax.jit(functools.partial(cider_loss, t=t, alpha=alpha, lamda=lamda))
    loss = loss_fn(z, target, mu)
    jax.block_until_ready(loss)

    # Pure-JAX reference mirroring the PyTorch forward.
    s = (z @ mu.T) / t
    lse = jax.nn.logsumexp(s, axis=1)
    picked = jnp.take_along_axis(s, target[:, None], axis=1)[:, 0]
    loss_comp_ref = jnp.mean(lse - picked)
    g = (mu @ mu.T) / t
    g = jnp.where(jnp.eye(C, dtype=bool), -jnp.inf, g)
    loss_dis_ref = math.log(1.0 / (C - 1)) + jnp.mean(jax.nn.logsumexp(g, axis=1))
    ref = alpha * loss_dis_ref + lamda * loss_comp_ref

    assert jnp.allclose(loss, ref, atol=1e-2, rtol=1e-2), (loss, ref)
    print("KERNEL_OK")
</pallas_src>

<mosaic_0001>
module attributes {stable_mosaic.version = 11 : i64} {
  func.func @_cider_kernel(%arg0: i32, %arg1: memref<32x128xf32, #tpu.memory_space<vmem>>, %arg2: memref<32x1xi32, #tpu.memory_space<vmem>>, %arg3: memref<10x128xf32, #tpu.memory_space<vmem>>, %arg4: memref<1x2x128xf32, #tpu.memory_space<vmem>>) attributes {dimension_semantics = [#tpu.dimension_semantics<parallel>], iteration_bounds = array<i64: 1>, scalar_prefetch = 0 : i64, scratch_operands = 0 : i64, tpu.core_type = #tpu.core_type<tc>, window_params = [{transform_indices = @transform_0, window_bounds = array<i64: 32, 128>}, {transform_indices = @transform_1, window_bounds = array<i64: 32, 1>}, {pipeline_mode = #tpu.pipeline_mode<synchronous>, transform_indices = @transform_2, window_bounds = array<i64: 10, 128>}, {transform_indices = @transform_3, window_bounds = array<i64: 1, 2, 128>}]} {
    %c0 = arith.constant 0 : index
    %c0_0 = arith.constant 0 : index
    %0 = vector.load %arg3[%c0, %c0_0] : memref<10x128xf32, #tpu.memory_space<vmem>>, vector<10x128xf32>
    %cst = arith.constant 1.000000e+01 : f32
    %1 = vector.broadcast %cst : f32 to vector<10x128xf32>
    %2 = arith.mulf %0, %1 : vector<10x128xf32>
    %c0_1 = arith.constant 0 : index
    %c0_2 = arith.constant 0 : index
    %3 = vector.load %arg1[%c0_1, %c0_2] : memref<32x128xf32, #tpu.memory_space<vmem>>, vector<32x128xf32>
    %cst_3 = arith.constant dense<0.000000e+00> : vector<32x10xf32>
    %4 = tpu.matmul %3, %2, %cst_3 {dimension_numbers = #tpu.dot_dimension_numbers<[1], [1], [0], [0], [0, 0, 1, 0], [], []>} : vector<32x128xf32>, vector<10x128xf32>, vector<32x10xf32> -> vector<32x10xf32>
    %cst_4 = arith.constant dense<0xFF800000> : vector<32xf32>
    %5 = vector.multi_reduction <maximumf>, %4, %cst_4 [1] : vector<32x10xf32> to vector<32xf32>
    %6 = vector.shape_cast %5 : vector<32xf32> to vector<32x1xf32>
    %7 = vector.broadcast %6 : vector<32x1xf32> to vector<32x10xf32>
    %8 = arith.subf %4, %7 : vector<32x10xf32>
    %9 = math.exp %8 : vector<32x10xf32>
    %cst_5 = arith.constant dense<0.000000e+00> : vector<32xf32>
    %10 = vector.multi_reduction <add>, %9, %cst_5 [1] : vector<32x10xf32> to vector<32xf32>
    %11 = vector.shape_cast %10 : vector<32xf32> to vector<32x1xf32>
    %12 = math.log %11 : vector<32x1xf32>
    %13 = arith.addf %6, %12 : vector<32x1xf32>
    %14 = tpu.iota {dimensions = array<i32: 1>} : vector<32x10xi32>
    %c0_6 = arith.constant 0 : index
    %c0_7 = arith.constant 0 : index
    %15 = vector.load %arg2[%c0_6, %c0_7] : memref<32x1xi32, #tpu.memory_space<vmem>>, vector<32x1xi32>
    %16 = vector.broadcast %15 : vector<32x1xi32> to vector<32x10xi32>
    %17 = arith.cmpi eq, %14, %16 : vector<32x10xi32>
    %cst_8 = arith.constant 0.000000e+00 : f32
    %18 = vector.broadcast %cst_8 : f32 to vector<32x10xf32>
    %19 = arith.select %17, %4, %18 : vector<32x10xi1>, vector<32x10xf32>
    %cst_9 = arith.constant dense<0.000000e+00> : vector<32xf32>
    %20 = vector.multi_reduction <add>, %19, %cst_9 [1] : vector<32x10xf32> to vector<32xf32>
    %21 = vector.shape_cast %20 : vector<32xf32> to vector<32x1xf32>
    %22 = tpu.iota {dimensions = array<i32: 0>} : vector<32x1xi32>
    %c32_i32 = arith.constant 32 : i32
    %23 = arith.muli %arg0, %c32_i32 : i32
    %24 = vector.broadcast %23 : i32 to vector<32x1xi32>
    %25 = arith.addi %22, %24 : vector<32x1xi32>
    %c32_i32_10 = arith.constant 32 : i32
    %26 = vector.broadcast %c32_i32_10 : i32 to vector<32x1xi32>
    %27 = arith.cmpi slt, %25, %26 : vector<32x1xi32>
    %28 = arith.subf %13, %21 : vector<32x1xf32>
    %cst_11 = arith.constant 0.000000e+00 : f32
    %29 = vector.broadcast %cst_11 : f32 to vector<32x1xf32>
    %30 = arith.select %27, %28, %29 : vector<32x1xi1>, vector<32x1xf32>
    %31 = vector.shape_cast %30 : vector<32x1xf32> to vector<1x32x1xf32>
    %cst_12 = arith.constant dense<0.000000e+00> : vector<1xf32>
    %32 = vector.multi_reduction <add>, %31, %cst_12 [1, 2] : vector<1x32x1xf32> to vector<1xf32>
    %33 = vector.shape_cast %32 : vector<1xf32> to vector<1x1x1xf32>
    %34 = vector.extract %33[0, 0, 0] : f32 from vector<1x1x1xf32>
    %35 = vector.broadcast %34 : f32 to vector<1x1xf32>
    %cst_13 = arith.constant dense<0.000000e+00> : vector<10x10xf32>
    %36 = tpu.matmul %0, %2, %cst_13 {dimension_numbers = #tpu.dot_dimension_numbers<[1], [1], [0], [0], [0, 0, 1, 0], [], []>} : vector<10x128xf32>, vector<10x128xf32>, vector<10x10xf32> -> vector<10x10xf32>
    %37 = tpu.iota {dimensions = array<i32: 0>} : vector<10x10xi32>
    %38 = tpu.iota {dimensions = array<i32: 1>} : vector<10x10xi32>
    %39 = arith.cmpi eq, %37, %38 : vector<10x10xi32>
    %cst_14 = arith.constant -1.000000e+30 : f32
    %40 = vector.broadcast %cst_14 : f32 to vector<10x10xf32>
    %41 = arith.select %39, %40, %36 : vector<10x10xi1>, vector<10x10xf32>
    %cst_15 = arith.constant dense<0xFF800000> : vector<10xf32>
    %42 = vector.multi_reduction <maximumf>, %41, %cst_15 [1] : vector<10x10xf32> to vector<10xf32>
    %43 = vector.shape_cast %42 : vector<10xf32> to vector<10x1xf32>
    %44 = vector.broadcast %43 : vector<10x1xf32> to vector<10x10xf32>
    %45 = arith.subf %41, %44 : vector<10x10xf32>
    %46 = math.exp %45 : vector<10x10xf32>
    %cst_16 = arith.constant dense<0.000000e+00> : vector<10xf32>
    %47 = vector.multi_reduction <add>, %46, %cst_16 [1] : vector<10x10xf32> to vector<10xf32>
    %48 = vector.shape_cast %47 : vector<10xf32> to vector<10x1xf32>
    %49 = math.log %48 : vector<10x1xf32>
    %50 = arith.addf %43, %49 : vector<10x1xf32>
    %51 = vector.shape_cast %50 : vector<10x1xf32> to vector<1x10x1xf32>
    %cst_17 = arith.constant dense<0.000000e+00> : vector<1xf32>
    %52 = vector.multi_reduction <add>, %51, %cst_17 [1, 2] : vector<1x10x1xf32> to vector<1xf32>
    %53 = vector.shape_cast %52 : vector<1xf32> to vector<1x1x1xf32>
    %54 = vector.extract %53[0, 0, 0] : f32 from vector<1x1x1xf32>
    %55 = vector.broadcast %54 : f32 to vector<1x1xf32>
    %56 = vector.shape_cast %35 : vector<1x1xf32> to vector<1x1xf32>
    %57 = vector.broadcast %56 : vector<1x1xf32> to vector<1x128xf32>
    %58 = vector.shape_cast %55 : vector<1x1xf32> to vector<1x1xf32>
    %59 = vector.broadcast %58 : vector<1x1xf32> to vector<1x128xf32>
    %60 = tpu.concatenate %57, %59 in 0 : vector<1x128xf32>, vector<1x128xf32> -> vector<2x128xf32>
    %c0_18 = arith.constant 0 : index
    %c0_19 = arith.constant 0 : index
    %c0_20 = arith.constant 0 : index
    %61 = vector.load %arg4[%c0_18, %c0_19, %c0_20] : memref<1x2x128xf32, #tpu.memory_space<vmem>>, vector<1x2x128xf32>
    %62 = vector.shape_cast %61 : vector<1x2x128xf32> to vector<2x128xf32>
    %63 = vector.shape_cast %60 : vector<2x128xf32> to vector<1x2x128xf32>
    tpu.vector_store %arg4[%c0_18, %c0_19, %c0_20], %63 {strides = array<i32>} : memref<1x2x128xf32, #tpu.memory_space<vmem>>, vector<1x2x128xf32>,
    return
  }
  func.func @transform_0(%arg0: i32) -> (i32, i32) {
    %c0_i32 = arith.constant 0 : i32
    %c0_i32_0 = arith.constant 0 : i32
    return %arg0, %c0_i32 : i32, i32
  }
  func.func @transform_1(%arg0: i32) -> (i32, i32) {
    %c0_i32 = arith.constant 0 : i32
    %c0_i32_0 = arith.constant 0 : i32
    return %arg0, %c0_i32 : i32, i32
  }
  func.func @transform_2(%arg0: i32) -> (i32, i32) {
    %c0_i32 = arith.constant 0 : i32
    %c0_i32_0 = arith.constant 0 : i32
    %c0_i32_1 = arith.constant 0 : i32
    return %c0_i32, %c0_i32_0 : i32, i32
  }
  func.func @transform_3(%arg0: i32) -> (i32, i32, i32) {
    %c0_i32 = arith.constant 0 : i32
    %c0_i32_0 = arith.constant 0 : i32
    %c0_i32_1 = arith.constant 0 : i32
    return %arg0, %c0_i32, %c0_i32_0 : i32, i32, i32
  }
}

</mosaic_0001>

<llo_original>
// kernel: cider_loss.1
$region0: #{cider_loss.1}
  #allocation0 [shape = 'u32[]', space=smem, size = 0x4, offset = 0x4, fixed_abs, tag = 'smem constant byte address 0x4 - core index']
  #allocation1 [shape = 'u32[144,128]{1,0:T(1,128)}', space=vmem, size = 0x12000, scoped, tag = 'internal scratch']
  %s0 = inlined_call_operand.vmem [shape: f32[32,128], index: 0, kind: input, shape index: {}]
  %s1 = inlined_call_operand.vmem [shape: s32[32,1], index: 1, kind: input, shape index: {}]
  %s2 = inlined_call_operand.hbm [shape: f32[10,128], index: 2, kind: input, shape index: {}]
  %s3 = inlined_call_operand.vmem [shape: f32[1,2,128], index: 3, kind: output, shape index: {}]
  %s4 = sld [smem:[#allocation0]]
  $region26: #{cider_loss.1} parent=0
    _
  %s6 = ssub.s32 1, %s4
  %s7 = scalar_select 0, %s6, %s4
  $region1: #{cider_loss.1} parent=0
    #allocation2 [shape = 'u8[8192]{0}', space=vmem, size = 0x2000, scoped, tag = 'input window, operand 2, single buffered']
    #allocation3 [shape = 's32[1]{0}', space=sflag, size = 0x4, scoped, tag = 'scoped memory for cider_loss.1']
    %8 = vsyncpa [#allocation3], 0
    // Predicated region
    $region2: #{cider_loss.1} parent=1 // pred_check
      _
    $region3: #{cider_loss.1} parent=1 // pred_check_branch
      %10 = sbr.rel (0) target = $region5
    $region4: #{cider_loss.1} parent=1 // pred_region
      _
    $region5: #{cider_loss.1} parent=1 // pred_fallthru
      _
    // Predicated region
    $region6: #{cider_loss.1} parent=1 // pred_check
      _
    $region7: #{cider_loss.1} parent=1 // pred_check_branch
      %12 = sbr.rel (0) target = $region9
    $region8: #{cider_loss.1} parent=1 // pred_region
      _
    $region9: #{cider_loss.1} parent=1 // pred_fallthru
      _
    // Predicated region
    $region10: #{cider_loss.1} parent=1 // pred_check
      _
    $region11: #{cider_loss.1} parent=1 // pred_check_branch
      %14 = sbr.rel (0) target = $region13
    $region12: #{cider_loss.1} parent=1 // pred_region
      %s16 = ssub.s32 256, 256
      %17 = vsyncadd [#allocation3], %s16
      %s18 = sshll.u32 [#allocation2], 4
      %s19 = int_to_ptr.vmem [resolvable:$true] %s18
      %24 = dma.hbm_to_vmem [thread:$0]  %s2, 256, %s19, [#allocation3], 128, 128, 8
    $region13: #{cider_loss.1} parent=1 // pred_fallthru
      _
    // Predicated region
    $region14: #{cider_loss.1} parent=1 // pred_check
      _
    $region15: #{cider_loss.1} parent=1 // pred_check_branch
      %26 = sbr.rel (0) target = $region17
    $region16: #{cider_loss.1} parent=1 // pred_region
      %27 = dma.done [#allocation3], 256
    $region17: #{cider_loss.1} parent=1 // pred_fallthru
      _
    %v28 = vld [vmem:[#allocation2] sm:$0xff]
    %v29 = vld [vmem:[#allocation2 + $0x8] sm:$0x3]
    %v30 = vmul.f32 %v28, 10.0
    %v31 = vmul.f32 %v29, 10.0
    %v32 = vld [vmem:[%s0] sm:$0xff]
    %v33 = vld [vmem:[%s0 + $0x8] sm:$0xff]
    %v34 = vld [vmem:[%s0 + $0x10] sm:$0xff]
    %v35 = vld [vmem:[%s0 + $0x18] sm:$0xff]
    %36 = vmatprep.subr.mxu0 0.0
    %37 = vmatpush1.xpose.msra.mxu0 0.0
    %38 = vmatprep.subr.mxu0 0.0
    %39 = vmatpush1.xpose.msra.mxu0 0.0
    %40 = vmatprep.subr.mxu0 0.0
    %41 = vmatpush1.xpose.msra.mxu0 0.0
    %42 = vmatprep.subr.mxu0 0.0
    %43 = vmatpush1.xpose.msra.mxu0 0.0
    %44 = vmatprep.subr.mxu0 0.0
    %45 = vmatpush1.xpose.msra.mxu0 0.0
    %46 = vmatprep.subr.mxu0 0.0
    %47 = vmatpush1.xpose.msra.mxu0 0.0
    %48 = vmatprep.subr.mxu0 0.0
    %49 = vmatpush1.xpose.msra.mxu0 0.0
    %50 = vmatprep.subr.mxu0 0.0
    %51 = vmatpush1.xpose.msra.mxu0 0.0
    %52 = vmatprep.subr.mxu0 0.0
    %53 = vmatpush1.xpose.msra.mxu0 0.0
    %54 = vmatprep.subr.mxu0 0.0
    %55 = vmatpush1.xpose.msra.mxu0 0.0
    %56 = vmatprep.subr.mxu0 0.0
    %57 = vmatpush1.xpose.msra.mxu0 0.0
    %58 = vmatprep.subr.mxu0 0.0
    %59 = vmatpush1.xpose.msra.mxu0 0.0
    %60 = vmatprep.subr.mxu0 0.0
    %61 = vmatpush1.xpose.msra.mxu0 0.0
    %62 = vmatprep.subr.mxu0 0.0
    %63 = vmatpush1.xpose.msra.mxu0 0.0
    %64 = vmatprep.subr.mxu0 0.0
    %65 = vmatpush1.xpose.msra.mxu0 %v31
    %66 = vmatprep.subr.mxu0 0.0
    %67 = vmatpush1.xpose.msra.mxu0 %v30
    %68 = vmatprep.subr.mxu0 0.0
    %69 = vmatpush2.xpose.msra.mxu0 0.0
    %70 = vmatprep.subr.mxu0 0.0
    %71 = vmatpush2.xpose.msra.mxu0 0.0
    %72 = vmatprep.subr.mxu0 0.0
    %73 = vmatpush2.xpose.msra.mxu0 0.0
    %74 = vmatprep.subr.mxu0 0.0
    %75 = vmatpush2.xpose.msra.mxu0 0.0
    %76 = vmatprep.subr.mxu0 0.0
    %77 = vmatpush2.xpose.msra.mxu0 0.0
    %78 = vmatprep.subr.mxu0 0.0
    %79 = vmatpush2.xpose.msra.mxu0 0.0
    %80 = vmatprep.subr.mxu0 0.0
    %81 = vmatpush2.xpose.msra.mxu0 0.0
    %82 = vmatprep.subr.mxu0 0.0
    %83 = vmatpush2.xpose.msra.mxu0 0.0
    %84 = vmatprep.subr.mxu0 0.0
    %85 = vmatpush2.xpose.msra.mxu0 0.0
    %86 = vmatprep.subr.mxu0 0.0
    %87 = vmatpush2.xpose.msra.mxu0 0.0
    %88 = vmatprep.subr.mxu0 0.0
    %89 = vmatpush2.xpose.msra.mxu0 0.0
    %90 = vmatprep.subr.mxu0 0.0
    %91 = vmatpush2.xpose.msra.mxu0 0.0
    %92 = vmatprep.subr.mxu0 0.0
    %93 = vmatpush2.xpose.msra.mxu0 0.0
    %94 = vmatprep.subr.mxu0 0.0
    %95 = vmatpush2.xpose.msra.mxu0 0.0
    %96 = vmatprep.subr.mxu0 0.0
    %97 = vmatpush2.xpose.msra.mxu0 0.0
    %98 = vmatprep.subr.mxu0 0.0
    %99 = vmatpush2.xpose.msra.mxu0 0.0
    %100 = vmatprep.mubr.f32.mxu0 0.0
    %101 = vmatmul.mubr.f32.gmra.mxu0 %v32
    %v102 = vpop.f32.mrf.mxu0
    %v103 = vadd.f32 0.0, %v102
    %v104 = vpop.f32.mrf.mxu0
    %105 = vmatprep.mubr.f32.mxu0 0.0
    %106 = vmatmul.mubr.f32.gmra.mxu0 %v33
    %v107 = vpop.f32.mrf.mxu0
    %v108 = vadd.f32 0.0, %v107
    %v109 = vpop.f32.mrf.mxu0
    %110 = vmatprep.mubr.f32.mxu0 0.0
    %111 = vmatmul.mubr.f32.gmra.mxu0 %v34
    %v112 = vpop.f32.mrf.mxu0
    %v113 = vadd.f32 0.0, %v112
    %v114 = vpop.f32.mrf.mxu0
    %115 = vmatprep.mubr.f32.mxu0 0.0
    %116 = vmatmul.mubr.f32.gmra.mxu0 %v35
    %v117 = vpop.f32.mrf.mxu0
    %v118 = vadd.f32 0.0, %v117
    %v119 = vpop.f32.mrf.mxu0
    %120 = vdwg.mxu0
    %vm121 = vcmask 80896
    %v122 = vsel %vm121, %v103, -inf
    %123 = vmax.xlane.f32.xlu0 %v122
    %v124 = vpop.xlane.xlu0 %123
    %v125 = vsel %vm121, %v108, -inf
    %126 = vmax.xlane.f32.xlu0 %v125
    %v127 = vpop.xlane.xlu0 %126
    %v128 = vsel %vm121, %v113, -inf
    %129 = vmax.xlane.f32.xlu0 %v128
    %v130 = vpop.xlane.xlu0 %129
    %v131 = vsel %vm121, %v118, -inf
    %132 = vmax.xlane.f32.xlu0 %v131
    %v133 = vpop.xlane.xlu0 %132
    %v134 = vsub.f32 %v103, %v124
    %v135 = vsub.f32 %v108, %v127
    %v136 = vsub.f32 %v113, %v130
    %v137 = vsub.f32 %v118, %v133
    %v138 = vmul.f32 %v134, 1.442695
    %v139 = vpow.pop %v138
    %v140 = vmul.f32 %v135, 1.442695
    %v141 = vpow.pop %v140
    %v142 = vmul.f32 %v136, 1.442695
    %v143 = vpow.pop %v142
    %v144 = vmul.f32 %v137, 1.442695
    %v145 = vpow.pop %v144
    %v146 = vsel %vm121, %v139, 0.0
    %147 = vadd.xlane.f32.xlu0 %v146
    %v148 = vpop.xlane.xlu0 %147
    %v149 = vsel %vm121, %v141, 0.0
    %150 = vadd.xlane.f32.xlu0 %v149
    %v151 = vpop.xlane.xlu0 %150
    %v152 = vsel %vm121, %v143, 0.0
    %153 = vadd.xlane.f32.xlu0 %v152
    %v154 = vpop.xlane.xlu0 %153
    %v155 = vsel %vm121, %v145, 0.0
    %156 = vadd.xlane.f32.xlu0 %v155
    %v157 = vpop.xlane.xlu0 %156
    %v158 = vlog2.pop %v148
    %v159 = vmul.f32 %v158, 0.6931472
    %v160 = vlog2.pop %v151
    %v161 = vmul.f32 %v160, 0.6931472
    %v162 = vlog2.pop %v154
    %v163 = vmul.f32 %v162, 0.6931472
    %v164 = vlog2.pop %v157
    %v165 = vmul.f32 %v164, 0.6931472
    %v166 = vadd.f32 %v124, %v159
    %v167 = vadd.f32 %v127, %v161
    %v168 = vadd.f32 %v130, %v163
    %v169 = vadd.f32 %v133, %v165
    %v170 = vlaneseq
    %v171 = vand.u32 %v170, 127
    %v172 = vld [vmem:[%s1] sm:$0xff]
    %v173 = vld [vmem:[%s1 + $0x8] sm:$0xff]
    %v174 = vld [vmem:[%s1 + $0x10] sm:$0xff]
    %v175 = vld [vmem:[%s1 + $0x18] sm:$0xff]
    %176 = vset.pattern.permute.xlu0 0
    %177 = vperm.xlu0 %176, %v172
    %v178 = vpop.permute.xlu0 %177
    %179 = vset.pattern.permute.xlu0 0
    %180 = vperm.xlu0 %179, %v173
    %v181 = vpop.permute.xlu0 %180
    %182 = vset.pattern.permute.xlu0 0
    %183 = vperm.xlu0 %182, %v174
    %v184 = vpop.permute.xlu0 %183
    %185 = vset.pattern.permute.xlu0 0
    %186 = vperm.xlu0 %185, %v175
    %v187 = vpop.permute.xlu0 %186
    %vm188 = vcmp.eq.s32.totalorder %v171, %v178
    %vm189 = vcmp.eq.s32.totalorder %v171, %v181
    %vm190 = vcmp.eq.s32.totalorder %v171, %v184
    %vm191 = vcmp.eq.s32.totalorder %v171, %v187
    %v192 = vsel %vm188, %v103, 0.0
    %v193 = vsel %vm189, %v108, 0.0
    %v194 = vsel %vm190, %v113, 0.0
    %v195 = vsel %vm191, %v118, 0.0
    %v196 = vsel %vm121, %v192, 0.0
    %197 = vadd.xlane.f32.xlu0 %v196
    %v198 = vpop.xlane.xlu0 %197
    %v199 = vsel %vm121, %v193, 0.0
    %200 = vadd.xlane.f32.xlu0 %v199
    %v201 = vpop.xlane.xlu0 %200
    %v202 = vsel %vm121, %v194, 0.0
    %203 = vadd.xlane.f32.xlu0 %v202
    %v204 = vpop.xlane.xlu0 %203
    %v205 = vsel %vm121, %v195, 0.0
    %206 = vadd.xlane.f32.xlu0 %v205
    %v207 = vpop.xlane.xlu0 %206
    %v208 = vlaneseq
    %v209 = vshrl.u32 %v208, 7
    %v210 = vadd.s32 %v209, 8
    %v211 = vadd.s32 %v209, 16
    %v212 = vadd.s32 %v209, 24
    %s213 = smul.u32 0, 32
    %v214 = vstv %s213
    %v215 = vadd.s32 %v209, %v214
    %v216 = vadd.s32 %v210, %v214
    %v217 = vadd.s32 %v211, %v214
    %v218 = vadd.s32 %v212, %v214
    %vm219 = vcmp.lt.s32.totalorder %v215, 32
    %vm220 = vcmp.lt.s32.totalorder %v216, 32
    %vm221 = vcmp.lt.s32.totalorder %v217, 32
    %vm222 = vcmp.lt.s32.totalorder %v218, 32
    %v223 = vsub.f32 %v166, %v198
    %v224 = vsub.f32 %v167, %v201
    %v225 = vsub.f32 %v168, %v204
    %v226 = vsub.f32 %v169, %v207
    %v227 = vsel %vm219, %v223, 0.0
    %v228 = vsel %vm220, %v224, 0.0
    %v229 = vsel %vm221, %v225, 0.0
    %v230 = vsel %vm222, %v226, 0.0
    %vm231 = vcmask 7168
    %v232 = vsel %vm231, %v227, 0.0
    %v233 = vsel %vm231, %v228, 0.0
    %v234 = vadd.f32 %v232, %v233
    %v235 = vsel %vm231, %v229, 0.0
    %v236 = vadd.f32 %v234, %v235
    %v237 = vsel %vm231, %v230, 0.0
    %v238 = vadd.f32 %v236, %v237
    %239 = vadd.xlane.f32.xlu0 %v238
    %v240 = vpop.xlane.xlu0 %239
    %v241 = vrot.slane %v240, 4
    %v242 = vadd.f32 %v240, %v241
    %v243 = vrot.slane %v242, 2
    %v244 = vadd.f32 %v242, %v243
    %v245 = vrot.slane %v244, 1
    %v246 = vadd.f32 %v244, %v245
    %s247 = vtos %v246
    %248 = vmatprep.subr.mxu0 0.0
    %249 = vmatpush1.xpose.msra.mxu0 0.0
    %250 = vmatprep.subr.mxu0 0.0
    %251 = vmatpush1.xpose.msra.mxu0 0.0
    %252 = vmatprep.subr.mxu0 0.0
    %253 = vmatpush1.xpose.msra.mxu0 0.0
    %254 = vmatprep.subr.mxu0 0.0
    %255 = vmatpush1.xpose.msra.mxu0 0.0
    %256 = vmatprep.subr.mxu0 0.0
    %257 = vmatpush1.xpose.msra.mxu0 0.0
    %258 = vmatprep.subr.mxu0 0.0
    %259 = vmatpush1.xpose.msra.mxu0 0.0
    %260 = vmatprep.subr.mxu0 0.0
    %261 = vmatpush1.xpose.msra.mxu0 0.0
    %262 = vmatprep.subr.mxu0 0.0
    %263 = vmatpush1.xpose.msra.mxu0 0.0
    %264 = vmatprep.subr.mxu0 0.0
    %265 = vmatpush1.xpose.msra.mxu0 0.0
    %266 = vmatprep.subr.mxu0 0.0
    %267 = vmatpush1.xpose.msra.mxu0 0.0
    %268 = vmatprep.subr.mxu0 0.0
    %269 = vmatpush1.xpose.msra.mxu0 0.0
    %270 = vmatprep.subr.mxu0 0.0
    %271 = vmatpush1.xpose.msra.mxu0 0.0
    %272 = vmatprep.subr.mxu0 0.0
    %273 = vmatpush1.xpose.msra.mxu0 0.0
    %274 = vmatprep.subr.mxu0 0.0
    %275 = vmatpush1.xpose.msra.mxu0 0.0
    %276 = vmatprep.subr.mxu0 0.0
    %277 = vmatpush1.xpose.msra.mxu0 %v31
    %278 = vmatprep.subr.mxu0 0.0
    %279 = vmatpush1.xpose.msra.mxu0 %v30
    %280 = vmatprep.subr.mxu0 0.0
    %281 = vmatpush2.xpose.msra.mxu0 0.0
    %282 = vmatprep.subr.mxu0 0.0
    %283 = vmatpush2.xpose.msra.mxu0 0.0
    %284 = vmatprep.subr.mxu0 0.0
    %285 = vmatpush2.xpose.msra.mxu0 0.0
    %286 = vmatprep.subr.mxu0 0.0
    %287 = vmatpush2.xpose.msra.mxu0 0.0
    %288 = vmatprep.subr.mxu0 0.0
    %289 = vmatpush2.xpose.msra.mxu0 0.0
    %290 = vmatprep.subr.mxu0 0.0
    %291 = vmatpush2.xpose.msra.mxu0 0.0
    %292 = vmatprep.subr.mxu0 0.0
    %293 = vmatpush2.xpose.msra.mxu0 0.0
    %294 = vmatprep.subr.mxu0 0.0
    %295 = vmatpush2.xpose.msra.mxu0 0.0
    %296 = vmatprep.subr.mxu0 0.0
    %297 = vmatpush2.xpose.msra.mxu0 0.0
    %298 = vmatprep.subr.mxu0 0.0
    %299 = vmatpush2.xpose.msra.mxu0 0.0
    %300 = vmatprep.subr.mxu0 0.0
    %301 = vmatpush2.xpose.msra.mxu0 0.0
    %302 = vmatprep.subr.mxu0 0.0
    %303 = vmatpush2.xpose.msra.mxu0 0.0
    %304 = vmatprep.subr.mxu0 0.0
    %305 = vmatpush2.xpose.msra.mxu0 0.0
    %306 = vmatprep.subr.mxu0 0.0
    %307 = vmatpush2.xpose.msra.mxu0 0.0
    %308 = vmatprep.subr.mxu0 0.0
    %309 = vmatpush2.xpose.msra.mxu0 0.0
    %310 = vmatprep.subr.mxu0 0.0
    %311 = vmatpush2.xpose.msra.mxu0 0.0
    %312 = vmatprep.mubr.f32.mxu0 0.0
    %313 = vmatmul.mubr.f32.gmra.mxu0 %v28
    %v314 = vpop.f32.mrf.mxu0
    %v315 = vadd.f32 0.0, %v314
    %v316 = vpop.f32.mrf.mxu0
    %317 = vmatprep.mubr.f32.mxu0 0.0
    %318 = vmatmul.mubr.f32.gmra.mxu0 %v29
    %v319 = vpop.f32.mrf.mxu0
    %v320 = vadd.f32 0.0, %v319
    %v321 = vpop.f32.mrf.mxu0
    %322 = vdwg.mxu0
    %vm323 = vcmp.eq.s32.totalorder %v209, %v171
    %vm324 = vcmp.eq.s32.totalorder %v210, %v171
    %v325 = vsel %vm323, -1e+30, %v315
    %v326 = vsel %vm324, -1e+30, %v320
    %v327 = vsel %vm121, %v325, -inf
    %328 = vmax.xlane.f32.xlu0 %v327
    %v329 = vpop.xlane.xlu0 %328
    %vm330 = vcmask 74752
    %v331 = vsel %vm330, %v326, -inf
    %332 = vmax.xlane.f32.xlu0 %v331
    %v333 = vpop.xlane.xlu0 %332
    %v334 = vsub.f32 %v325, %v329
    %v335 = vsub.f32 %v326, %v333
    %v336 = vmul.f32 %v334, 1.442695
    %v337 = vpow.pop %v336
    %v338 = vmul.f32 %v335, 1.442695
    %v339 = vpow.pop %v338
    %v340 = vsel %vm121, %v337, 0.0
    %341 = vadd.xlane.f32.xlu0 %v340
    %v342 = vpop.xlane.xlu0 %341
    %v343 = vsel %vm330, %v339, 0.0
    %344 = vadd.xlane.f32.xlu0 %v343
    %v345 = vpop.xlane.xlu0 %344
    %v346 = vlog2.pop %v342
    %v347 = vmul.f32 %v346, 0.6931472
    %v348 = vlog2.pop %v345
    %v349 = vmul.f32 %v348, 0.6931472
    %v350 = vadd.f32 %v329, %v347
    %v351 = vadd.f32 %v333, %v349
    %v352 = vsel %vm231, %v350, 0.0
    %vm353 = vcmask 1024
    %v354 = vsel %vm353, %v351, 0.0
    %v355 = vadd.f32 %v352, %v354
    %356 = vadd.xlane.f32.xlu0 %v355
    %v357 = vpop.xlane.xlu0 %356
    %v358 = vrot.slane %v357, 4
    %v359 = vadd.f32 %v357, %v358
    %v360 = vrot.slane %v359, 2
    %v361 = vadd.f32 %v359, %v360
    %v362 = vrot.slane %v361, 1
    %v363 = vadd.f32 %v361, %v362
    %s364 = vtos %v363
    %v365 = vstv %s247
    %v366 = vstv %s364
    %vm367 = vcmask 1040384
    %v368 = vsel %vm367, %v365, %v366
    %369 = vst [vmem:[%s3] sm:$0x3] %v368
    // Predicated region
    $region18: #{cider_loss.1} parent=1 // pred_check
      _
    $region19: #{cider_loss.1} parent=1 // pred_check_branch
      %371 = sbr.rel (0) target = $region21
    $region20: #{cider_loss.1} parent=1 // pred_region
      _
    $region21: #{cider_loss.1} parent=1 // pred_fallthru
      _
    // Predicated region
    $region22: #{cider_loss.1} parent=1 // pred_check
      _
    $region23: #{cider_loss.1} parent=1 // pred_check_branch
      %373 = sbr.rel (0) target = $region25
    $region24: #{cider_loss.1} parent=1 // pred_region
      _
    $region25: #{cider_loss.1} parent=1 // pred_fallthru
      _
    %374 = vsyncpa [#allocation3], 1

</llo_original>
